<compile_context>
chip_gen: v6e
topology: v6e:2x2x1
jax: 0.10.0
libtpu: 0.0.40
codegen_flags: <defaults>
</compile_context>

<pallas_src>
import functools

import numpy as np
import jax
import jax.numpy as jnp
from jax.experimental import pallas as pl
from jax.experimental.pallas import tpu as pltpu


def _round_up(x, m):
    return ((x + m - 1) // m) * m


def _vmem_capacity_bytes():
    """Physical VMEM per TensorCore; conservative fallback if the query fails."""
    try:
        cap = int(getattr(pltpu.get_tpu_info(), "vmem_capacity_bytes", 0))
        if cap > 0:
            return cap
    except Exception:
        pass
    return 64 << 20          # v7x per-TC value == the smallest current chip


def _num_tensorcores():
    """TensorCores per chip (2 on v7x, 1 on v5e/v6e); safe fallback = 1."""
    try:
        info = pltpu.get_tpu_info()
        for name in ("num_tensorcores", "tensorcore_count", "num_cores",
                     "cores_per_chip", "core_count"):
            n = getattr(info, name, None)
            if isinstance(n, int) and n > 0:
                return n
    except Exception:
        pass
    try:
        if "v7" in jax.devices()[0].device_kind.lower():
            return 2
    except Exception:
        pass
    return 1


def _pick_tile_p(hw, c_in2, in_itemsize, c_out2, out_itemsize,
                 budget_bytes, cap=4096):
    """Largest multiple-of-128 pixel tile whose VMEM working set fits budget.

    Working set = double-buffered x_cat tile + double-buffered output tile
    (per lane) + double-buffered weight & shift blocks (fixed).
    """
    tile = max(128, min(cap, _round_up(hw, 128)))
    fixed = 2 * c_out2 * c_in2 * in_itemsize + 2 * c_out2 * 4
    per_lane = 2 * (c_in2 * in_itemsize + c_out2 * out_itemsize)
    while tile > 128 and fixed + tile * per_lane > budget_bytes:
        tile -= 128
    return tile


def _fu_kernel(x_ref, w_ref, shift_ref, o_ref):
    """Fused 1x1 conv (single 2C-deep matmul) + folded-BN shift + ReLU.

    Block shapes:
      x_ref     : (1, 2C, TILE_P)     compute dtype (bf16 by default)
      w_ref     : (Cout2, 2C)         compute dtype
      shift_ref : (Cout2, 1)          f32
      o_ref     : (1, Cout2, TILE_P)  compute dtype
    """
    y = jnp.dot(w_ref[...], x_ref[0], preferred_element_type=jnp.float32)
    y = y + shift_ref[...]                       # broadcast over lanes
    o_ref[0] = jnp.maximum(y, 0.0).astype(o_ref.dtype)


def _pointwise_conv_bn_relu(x_cat, w_cat, shift):
    """x_cat: (B, 2C, HW); w_cat: (Cout2, 2C); shift: (Cout2, 1) f32.

    Returns (B, Cout2, HW) in x_cat.dtype.
    """
    B, C2, HW = x_cat.shape
    Cout2 = w_cat.shape[0]
    in_itemsize = jnp.dtype(x_cat.dtype).itemsize
    out_dtype = x_cat.dtype
    out_itemsize = jnp.dtype(out_dtype).itemsize

    vmem_cap = _vmem_capacity_bytes()
    budget = min(vmem_cap // 4, 20 << 20)        # ~20 MiB v5e/v6e, ~16 MiB v7x
    vmem_limit = min(vmem_cap // 2, 32 << 20)

    tile_p = _pick_tile_p(HW, C2, in_itemsize, Cout2, out_itemsize, budget)
    if B == 1 and HW > 128 and _num_tensorcores() >= 2:
        # Only split the (parallel) pixel axis when a second TensorCore exists
        # to take the other half; on 1-TC chips splitting is pure overhead.
        tile_p = max(128, min(tile_p, _round_up((HW + 1) // 2, 128)))

    grid = (B, pl.cdiv(HW, tile_p))

    flops = 2 * B * HW * C2 * Cout2              # one (Cout2 x 2C) @ (2C x HW)
    bytes_accessed = (B * C2 * HW * in_itemsize          # x_cat
                      + Cout2 * C2 * in_itemsize          # weights
                      + Cout2 * 4                         # shift
                      + B * Cout2 * HW * out_itemsize)    # output

    return pl.pallas_call(
        _fu_kernel,
        out_shape=jax.ShapeDtypeStruct((B, Cout2, HW), out_dtype),
        grid_spec=pltpu.PrefetchScalarGridSpec(
            num_scalar_prefetch=0,
            grid=grid,
            in_specs=[
                pl.BlockSpec((1, C2, tile_p), lambda b, p: (b, 0, p)),
                pl.BlockSpec((Cout2, C2), lambda b, p: (0, 0)),
                pl.BlockSpec((Cout2, 1), lambda b, p: (0, 0)),
            ],
            out_specs=pl.BlockSpec((1, Cout2, tile_p), lambda b, p: (b, 0, p)),
        ),
        compiler_params=pltpu.CompilerParams(
            dimension_semantics=("parallel", "parallel"),
            vmem_limit_bytes=vmem_limit),
        cost_estimate=pl.CostEstimate(
            flops=flops, transcendentals=0, bytes_accessed=bytes_accessed),
    )(x_cat, w_cat, shift)


def fourier_unit_forward(x, conv_w, gamma, beta, run_mean, run_var,
                         eps=1e-5, fft_norm="ortho",
                         compute_dtype=jnp.bfloat16):
    """FourierUnit.forward for x in NCHW (B, C, H, W), float32.

    conv_w: (2*out_channels, 2*in_channels) == PyTorch conv.weight[:, :, 0, 0]
            (columns ordered [c0_re, c0_im, ...], rows [o0_re, o0_im, ...] —
             exactly the PyTorch layout).
    gamma/beta/run_mean/run_var: (2*out_channels,) BatchNorm params (eval mode).
    """
    # TODO(synk): spatial_scale_factor / spectral_pos_encoding / gaussian-mask
    # branches of the PyTorch module are not implemented (defaults are off).
    B, C, H, W = x.shape
    ffted = jnp.fft.rfft2(x, norm=fft_norm)            # (B, C, H, Wf) complex64
    Wf = ffted.shape[-1]
    HW = H * Wf

    # Single concatenated [all-real ; all-imag] channels-first input.  The
    # real/imag extraction, channel concat and compute-dtype cast are one
    # elementwise expression so XLA emits a single HBM pass for them.
    x_cat = jnp.concatenate([ffted.real, ffted.imag], axis=1)   # (B, 2C, H, Wf)
    x_cat = x_cat.reshape(B, 2 * C, HW).astype(compute_dtype)

    # Fold eval-mode BatchNorm: scale into the weight rows, bias into a shift.
    # TODO(synk): training-mode BatchNorm (batch statistics) would need an
    # extra reduction pass over the conv output; eval-mode running stats used.
    Cout2 = conv_w.shape[0]
    Cout = Cout2 // 2
    inv_std = 1.0 / jnp.sqrt(run_var + eps)
    scale = gamma * inv_std                            # (Cout2,)
    w_folded = conv_w * scale[:, None]                 # (Cout2, Cin2)
    shift = beta - run_mean * scale                    # (Cout2,)

    # Columns: interleaved [re, im, ...] -> blocked [all re ; all im] to match
    # x_cat.  Rows: interleaved (o_re, o_im) -> blocked [all re ; all im] so
    # the complex() build below is two contiguous slices (static permutation).
    row_perm = np.concatenate([np.arange(0, Cout2, 2), np.arange(1, Cout2, 2)])
    w_cat = jnp.concatenate([w_folded[:, 0::2], w_folded[:, 1::2]], axis=1)
    w_cat = w_cat[row_perm].astype(compute_dtype)                # (Cout2, 2C)
    shift_b = shift[row_perm].reshape(Cout2, 1).astype(jnp.float32)

    y = _pointwise_conv_bn_relu(x_cat, w_cat, shift_b)  # (B, Cout2, HW)

    y = y.reshape(B, Cout2, H, Wf)
    y_re = y[:, :Cout].astype(jnp.float32)              # contiguous slices
    y_im = y[:, Cout:].astype(jnp.float32)
    y_c = jax.lax.complex(y_re, y_im)                    # (B, Cout, H, Wf)
    return jnp.fft.irfft2(y_c, s=(H, W), norm=fft_norm)


def _reference(x, conv_w, gamma, beta, rm, rv, eps=1e-5, fft_norm="ortho"):
    """Pure-JAX f32 reference of the same forward pass (no Pallas)."""
    B, C, H, W = x.shape
    ffted = jnp.fft.rfft2(x, norm=fft_norm)
    Wf = ffted.shape[-1]
    fr = jnp.stack((ffted.real, ffted.imag), axis=2).reshape(B, 2 * C, H, Wf)
    y = jnp.einsum("bihw,oi->bohw", fr, conv_w)
    scale = gamma / jnp.sqrt(rv + eps)
    shift = beta - rm * scale
    y = y * scale[None, :, None, None] + shift[None, :, None, None]
    y = jnp.maximum(y, 0.0)
    Cout = y.shape[1] // 2
    y = y.reshape(B, Cout, 2, H, Wf)
    yc = jax.lax.complex(y[:, :, 0], y[:, :, 1])
    return jnp.fft.irfft2(yc, s=(H, W), norm=fft_norm)


if __name__ == "__main__":
    key = jax.random.PRNGKey(0)
    B, C, H, W = 2, 4, 16, 16            # batch=2, in_channels=4, 16x16 spatial
    out_channels = 4
    Cin2, Cout2 = 2 * C, 2 * out_channels

    k1, k2, k3, k4 = jax.random.split(key, 4)
    x = jax.random.normal(k1, (B, C, H, W), jnp.float32)
    # PyTorch Conv2d weight (Cout2, Cin2, 1, 1) -> pass its (Cout2, Cin2) slice.
    conv_w = jax.random.normal(k2, (Cout2, Cin2), jnp.float32) * 0.1
    gamma = 1.0 + 0.1 * jax.random.normal(k3, (Cout2,), jnp.float32)
    beta = 0.1 * jax.random.normal(k4, (Cout2,), jnp.float32)
    run_mean = jnp.zeros((Cout2,), jnp.float32)
    run_var = jnp.ones((Cout2,), jnp.float32)

    ref = jax.block_until_ready(
        _reference(x, conv_w, gamma, beta, run_mean, run_var))

    # Default (bf16 compute + bf16 kernel output) path — looser tolerance.
    fwd = jax.jit(fourier_unit_forward)
    out = jax.block_until_ready(
        fwd(x, conv_w, gamma, beta, run_mean, run_var))
    assert out.shape == (B, out_channels, H, W), out.shape
    np.testing.assert_allclose(np.asarray(out), np.asarray(ref),
                               rtol=5e-2, atol=5e-2)

    # Pure-f32 path for tighter numerical fidelity to the PyTorch module.
    fwd_f32 = jax.jit(functools.partial(fourier_unit_forward,
                                        compute_dtype=jnp.float32))
    out_f32 = jax.block_until_ready(
        fwd_f32(x, conv_w, gamma, beta, run_mean, run_var))
    np.testing.assert_allclose(np.asarray(out_f32), np.asarray(ref),
                               rtol=1e-3, atol=1e-3)

    print("KERNEL_OK")
</pallas_src>

<mosaic_0001>
module attributes {stable_mosaic.version = 11 : i64} {
  func.func @_fu_kernel(%arg0: i32, %arg1: i32, %arg2: memref<1x8x256xbf16, #tpu.memory_space<vmem>>, %arg3: memref<8x8xbf16, #tpu.memory_space<vmem>>, %arg4: memref<8x1xf32, #tpu.memory_space<vmem>>, %arg5: memref<1x8x256xbf16, #tpu.memory_space<vmem>>) attributes {dimension_semantics = [#tpu.dimension_semantics<parallel>, #tpu.dimension_semantics<parallel>], iteration_bounds = array<i64: 2, 1>, scalar_prefetch = 0 : i64, scratch_operands = 0 : i64, tpu.core_type = #tpu.core_type<tc>, window_params = [{transform_indices = @transform_0, window_bounds = array<i64: 1, 8, 256>}, {pipeline_mode = #tpu.pipeline_mode<synchronous>, transform_indices = @transform_1, window_bounds = array<i64: 8, 8>}, {pipeline_mode = #tpu.pipeline_mode<synchronous>, transform_indices = @transform_2, window_bounds = array<i64: 8, 1>}, {transform_indices = @transform_3, window_bounds = array<i64: 1, 8, 256>}]} {
    %c0 = arith.constant 0 : index
    %c0_0 = arith.constant 0 : index
    %0 = vector.load %arg3[%c0, %c0_0] : memref<8x8xbf16, #tpu.memory_space<vmem>>, vector<8x8xbf16>
    %c0_1 = arith.constant 0 : index
    %c0_2 = arith.constant 0 : index
    %c0_3 = arith.constant 0 : index
    %1 = vector.load %arg2[%c0_1, %c0_2, %c0_3] : memref<1x8x256xbf16, #tpu.memory_space<vmem>>, vector<1x8x256xbf16>
    %2 = vector.shape_cast %1 : vector<1x8x256xbf16> to vector<8x256xbf16>
    %cst = arith.constant dense<0.000000e+00> : vector<8x256xf32>
    %3 = tpu.matmul %0, %2, %cst {dimension_numbers = #tpu.dot_dimension_numbers<[1], [0], [0], [1], [0, 0, 1, 1], [], []>} : vector<8x8xbf16>, vector<8x256xbf16>, vector<8x256xf32> -> vector<8x256xf32>
    %c0_4 = arith.constant 0 : index
    %c0_5 = arith.constant 0 : index
    %4 = vector.load %arg4[%c0_4, %c0_5] : memref<8x1xf32, #tpu.memory_space<vmem>>, vector<8x1xf32>
    %5 = vector.broadcast %4 : vector<8x1xf32> to vector<8x256xf32>
    %6 = arith.addf %3, %5 : vector<8x256xf32>
    %cst_6 = arith.constant 0.000000e+00 : f32
    %7 = vector.broadcast %cst_6 : f32 to vector<8x256xf32>
    %8 = arith.maximumf %6, %7 : vector<8x256xf32>
    %9 = arith.truncf %8 : vector<8x256xf32> to vector<8x256xbf16>
    %c0_7 = arith.constant 0 : index
    %c0_8 = arith.constant 0 : index
    %c0_9 = arith.constant 0 : index
    %10 = vector.load %arg5[%c0_7, %c0_8, %c0_9] : memref<1x8x256xbf16, #tpu.memory_space<vmem>>, vector<1x8x256xbf16>
    %11 = vector.shape_cast %10 : vector<1x8x256xbf16> to vector<8x256xbf16>
    %12 = vector.shape_cast %9 : vector<8x256xbf16> to vector<1x8x256xbf16>
    tpu.vector_store %arg5[%c0_7, %c0_8, %c0_9], %12 {strides = array<i32>} : memref<1x8x256xbf16, #tpu.memory_space<vmem>>, vector<1x8x256xbf16>,
    return
  }
  func.func @transform_0(%arg0: i32, %arg1: i32) -> (i32, i32, i32) {
    %c0_i32 = arith.constant 0 : i32
    %c0_i32_0 = arith.constant 0 : i32
    return %arg0, %c0_i32, %arg1 : i32, i32, i32
  }
  func.func @transform_1(%arg0: i32, %arg1: i32) -> (i32, i32) {
    %c0_i32 = arith.constant 0 : i32
    %c0_i32_0 = arith.constant 0 : i32
    %c0_i32_1 = arith.constant 0 : i32
    return %c0_i32, %c0_i32_0 : i32, i32
  }
  func.func @transform_2(%arg0: i32, %arg1: i32) -> (i32, i32) {
    %c0_i32 = arith.constant 0 : i32
    %c0_i32_0 = arith.constant 0 : i32
    %c0_i32_1 = arith.constant 0 : i32
    return %c0_i32, %c0_i32_0 : i32, i32
  }
  func.func @transform_3(%arg0: i32, %arg1: i32) -> (i32, i32, i32) {
    %c0_i32 = arith.constant 0 : i32
    %c0_i32_0 = arith.constant 0 : i32
    return %arg0, %c0_i32, %arg1 : i32, i32, i32
  }
}

</mosaic_0001>

<llo_original>
// kernel: reverse.0
$region0: #{reverse.0}
  %s0 = inlined_call_operand.vmem [shape: f32[2,4,16,7], index: 0, kind: input, shape index: {}]
  %s1 = inlined_call_operand.vmem [shape: f32[2,4,16,7], index: 1, kind: output, shape index: {}]
  $region1: #{reverse.0} parent=0
    #allocation0 [shape = 'u8[65536]{0}', space=vmem, size = 0x10000, scoped, tag = 'operand span for operand 0']
    #allocation1 [shape = 'u8[32768]{0}', space=vmem, size = 0x8000, scoped, tag = 'operand span for operand 1']
    %s2 = scalar_lea.vmem [#allocation0], 8
    // Predicated region
    $region2: #{reverse.0} parent=1 // pred_check
      _
    $region3: #{reverse.0} parent=1 // pred_check_branch
      %4 = sbr.rel (0) target = $region5
    $region4: #{reverse.0} parent=1 // pred_region
      // Predicated region
      $region6: #{reverse.0} parent=4 // pred_check
        _
      $region7: #{reverse.0} parent=4 // pred_check_branch
        %6 = sbr.rel (0) target = $region9
      $region8: #{reverse.0} parent=4 // pred_region
        // Predicated region
        $region21: #{reverse.0} parent=8 // pred_check
          _
        $region22: #{reverse.0} parent=8 // pred_check_branch
          %36 = sbr.rel (0) target = $region24
        $region23: #{reverse.0} parent=8 // pred_region
          loop: start=0, step=1, limit=1
          $region25: #{reverse.0} parent=23 // loop_pre_header
            _
          $region26: #{reverse.0} parent=23 // loop_header
            %s38 = sphi 0, %s42
            %p39 = scmp.ge.s32.totalorder %s38, 1
            %s43 = sphi %s0, %s0
            %s44 = sphi %s2, %s2
          $region27: #{reverse.0} parent=23 // loop_header_branch
            %41 = sbr.rel (%p39) target = $region31
          $region28: #{reverse.0} parent=23 // loop_body
            %v45 = vld [vmem:[%s43] sm:$0xff]
            %46 = vst [vmem:[%s44] sm:$0xff] %v45
            %v47 = vld [vmem:[%s43 + $0x8] sm:$0xff]
            %48 = vst [vmem:[%s44 + $0x10] sm:$0xff] %v47
            %v49 = vld [vmem:[%s43 + $0x10] sm:$0xff]
            %50 = vst [vmem:[%s44 + $0x20] sm:$0xff] %v49
            %v51 = vld [vmem:[%s43 + $0x18] sm:$0xff]
            %52 = vst [vmem:[%s44 + $0x30] sm:$0xff] %v51
            %v53 = vld [vmem:[%s43 + $0x20] sm:$0xff]
            %54 = vst [vmem:[%s44 + $0x40] sm:$0xff] %v53
            %v55 = vld [vmem:[%s43 + $0x28] sm:$0xff]
            %56 = vst [vmem:[%s44 + $0x50] sm:$0xff] %v55
            %v57 = vld [vmem:[%s43 + $0x30] sm:$0xff]
            %58 = vst [vmem:[%s44 + $0x60] sm:$0xff] %v57
            %v59 = vld [vmem:[%s43 + $0x38] sm:$0xff]
            %60 = vst [vmem:[%s44 + $0x70] sm:$0xff] %v59
          $region29: #{reverse.0} parent=23 // loop_footer
            %s42 = sadd.s32 1, %s38
          $region30: #{reverse.0} parent=23 // loop_footer_branch
            %37 = sbr.rel target = $region26
          $region31: #{reverse.0} parent=23 // loop_exit
            _
        $region24: #{reverse.0} parent=8 // pred_fallthru
          _
        // Predicated region
        $region32: #{reverse.0} parent=8 // pred_check
          _
        $region33: #{reverse.0} parent=8 // pred_check_branch
          %62 = sbr.rel target = $region35
        $region34: #{reverse.0} parent=8 // pred_region
          _
        $region35: #{reverse.0} parent=8 // pred_fallthru
          _
      $region9: #{reverse.0} parent=4 // pred_fallthru
        _
      // Predicated region
      $region10: #{reverse.0} parent=4 // pred_check
        _
      $region11: #{reverse.0} parent=4 // pred_check_branch
        %8 = sbr.rel target = $region13
      $region12: #{reverse.0} parent=4 // pred_region
        %s10 = ssub.s32 256, 1
        loop: start=0, step=1, limit=1
        $region14: #{reverse.0} parent=12 // loop_pre_header
          _
        $region15: #{reverse.0} parent=12 // loop_header
          %s12 = sphi 0, %s16
          %p13 = scmp.ge.s32.totalorder %s12, 1
          %s17 = sphi %s0, %s0
          %s18 = sphi %s2, %s2
        $region16: #{reverse.0} parent=12 // loop_header_branch
          %15 = sbr.rel (%p13) target = $region20
        $region17: #{reverse.0} parent=12 // loop_body
          %v19 = vld [vmem:[%s17] sm:%s10]
          %20 = vst [vmem:[%s18] sm:%s10] %v19
          %v21 = vld [vmem:[%s17 + $0x8] sm:%s10]
          %22 = vst [vmem:[%s18 + $0x10] sm:%s10] %v21
          %v23 = vld [vmem:[%s17 + $0x10] sm:%s10]
          %24 = vst [vmem:[%s18 + $0x20] sm:%s10] %v23
          %v25 = vld [vmem:[%s17 + $0x18] sm:%s10]
          %26 = vst [vmem:[%s18 + $0x30] sm:%s10] %v25
          %v27 = vld [vmem:[%s17 + $0x20] sm:%s10]
          %28 = vst [vmem:[%s18 + $0x40] sm:%s10] %v27
          %v29 = vld [vmem:[%s17 + $0x28] sm:%s10]
          %30 = vst [vmem:[%s18 + $0x50] sm:%s10] %v29
          %v31 = vld [vmem:[%s17 + $0x30] sm:%s10]
          %32 = vst [vmem:[%s18 + $0x60] sm:%s10] %v31
          %v33 = vld [vmem:[%s17 + $0x38] sm:%s10]
          %34 = vst [vmem:[%s18 + $0x70] sm:%s10] %v33
        $region18: #{reverse.0} parent=12 // loop_footer
          %s16 = sadd.s32 1, %s12
        $region19: #{reverse.0} parent=12 // loop_footer_branch
          %11 = sbr.rel target = $region15
        $region20: #{reverse.0} parent=12 // loop_exit
          _
      $region13: #{reverse.0} parent=4 // pred_fallthru
        _
    $region5: #{reverse.0} parent=1 // pred_fallthru
      _
    %63 = vnop
    %s64 = scalar_lea.vmem [#allocation0], 7
    %v65 = vld [vmem:[%s64] ss:$-1 sm:$0xff]
    %v66 = vrot.slane %v65, 1
    %67 = vst [vmem:[#allocation1] sm:$0xff] %v66
    %s68 = scalar_lea.vmem [#allocation0], 8
    %s69 = scalar_lea.vmem %s68, 7 [#allocation0]
    %v70 = vld [vmem:[%s69] ss:$-1 sm:$0xff]
    %v71 = vrot.slane %v70, 1
    %v72 = vlaneseq
    %v73 = vshrl.u32 %v72, 7
    %vm74 = vcmp.lt.s32.totalorder %v73, 7
    %75 = vst.msk [vmem:[#allocation1] sm:$0xff] %vm74, %v71
    %s76 = scalar_lea.vmem [#allocation1], 8
    %s77 = scalar_lea.vmem [#allocation0], 16
    %s78 = scalar_lea.vmem %s77, 7 [#allocation0]
    %v79 = vld [vmem:[%s78] ss:$-1 sm:$0xff]
    %v80 = vrot.slane %v79, 1
    %81 = vst [vmem:[%s76] sm:$0xff] %v80
    %s82 = scalar_lea.vmem %s77, 8 [#allocation0]
    %s83 = scalar_lea.vmem %s82, 7 [#allocation0]
    %v84 = vld [vmem:[%s83] ss:$-1 sm:$0xff]
    %v85 = vrot.slane %v84, 1
    %v86 = vlaneseq
    %v87 = vshrl.u32 %v86, 7
    %vm88 = vcmp.lt.s32.totalorder %v87, 7
    %89 = vst.msk [vmem:[%s76] sm:$0xff] %vm88, %v85
    %s90 = scalar_lea.vmem [#allocation1], 16
    %s91 = scalar_lea.vmem [#allocation0], 32
    %s92 = scalar_lea.vmem %s91, 7 [#allocation0]
    %v93 = vld [vmem:[%s92] ss:$-1 sm:$0xff]
    %v94 = vrot.slane %v93, 1
    %95 = vst [vmem:[%s90] sm:$0xff] %v94
    %s96 = scalar_lea.vmem %s91, 8 [#allocation0]
    %s97 = scalar_lea.vmem %s96, 7 [#allocation0]
    %v98 = vld [vmem:[%s97] ss:$-1 sm:$0xff]
    %v99 = vrot.slane %v98, 1
    %v100 = vlaneseq
    %v101 = vshrl.u32 %v100, 7
    %vm102 = vcmp.lt.s32.totalorder %v101, 7
    %103 = vst.msk [vmem:[%s90] sm:$0xff] %vm102, %v99
    %s104 = scalar_lea.vmem [#allocation1], 24
    %s105 = scalar_lea.vmem [#allocation0], 48
    %s106 = scalar_lea.vmem %s105, 7 [#allocation0]
    %v107 = vld [vmem:[%s106] ss:$-1 sm:$0xff]
    %v108 = vrot.slane %v107, 1
    %109 = vst [vmem:[%s104] sm:$0xff] %v108
    %s110 = scalar_lea.vmem %s105, 8 [#allocation0]
    %s111 = scalar_lea.vmem %s110, 7 [#allocation0]
    %v112 = vld [vmem:[%s111] ss:$-1 sm:$0xff]
    %v113 = vrot.slane %v112, 1
    %v114 = vlaneseq
    %v115 = vshrl.u32 %v114, 7
    %vm116 = vcmp.lt.s32.totalorder %v115, 7
    %117 = vst.msk [vmem:[%s104] sm:$0xff] %vm116, %v113
    %s118 = scalar_lea.vmem [#allocation1], 32
    %s119 = scalar_lea.vmem [#allocation0], 64
    %s120 = scalar_lea.vmem %s119, 7 [#allocation0]
    %v121 = vld [vmem:[%s120] ss:$-1 sm:$0xff]
    %v122 = vrot.slane %v121, 1
    %123 = vst [vmem:[%s118] sm:$0xff] %v122
    %s124 = scalar_lea.vmem %s119, 8 [#allocation0]
    %s125 = scalar_lea.vmem %s124, 7 [#allocation0]
    %v126 = vld [vmem:[%s125] ss:$-1 sm:$0xff]
    %v127 = vrot.slane %v126, 1
    %v128 = vlaneseq
    %v129 = vshrl.u32 %v128, 7
    %vm130 = vcmp.lt.s32.totalorder %v129, 7
    %131 = vst.msk [vmem:[%s118] sm:$0xff] %vm130, %v127
    %s132 = scalar_lea.vmem [#allocation1], 40
    %s133 = scalar_lea.vmem [#allocation0], 80
    %s134 = scalar_lea.vmem %s133, 7 [#allocation0]
    %v135 = vld [vmem:[%s134] ss:$-1 sm:$0xff]
    %v136 = vrot.slane %v135, 1
    %137 = vst [vmem:[%s132] sm:$0xff] %v136
    %s138 = scalar_lea.vmem %s133, 8 [#allocation0]
    %s139 = scalar_lea.vmem %s138, 7 [#allocation0]
    %v140 = vld [vmem:[%s139] ss:$-1 sm:$0xff]
    %v141 = vrot.slane %v140, 1
    %v142 = vlaneseq
    %v143 = vshrl.u32 %v142, 7
    %vm144 = vcmp.lt.s32.totalorder %v143, 7
    %145 = vst.msk [vmem:[%s132] sm:$0xff] %vm144, %v141
    %s146 = scalar_lea.vmem [#allocation1], 48
    %s147 = scalar_lea.vmem [#allocation0], 96
    %s148 = scalar_lea.vmem %s147, 7 [#allocation0]
    %v149 = vld [vmem:[%s148] ss:$-1 sm:$0xff]
    %v150 = vrot.slane %v149, 1
    %151 = vst [vmem:[%s146] sm:$0xff] %v150
    %s152 = scalar_lea.vmem %s147, 8 [#allocation0]
    %s153 = scalar_lea.vmem %s152, 7 [#allocation0]
    %v154 = vld [vmem:[%s153] ss:$-1 sm:$0xff]
    %v155 = vrot.slane %v154, 1
    %v156 = vlaneseq
    %v157 = vshrl.u32 %v156, 7
    %vm158 = vcmp.lt.s32.totalorder %v157, 7
    %159 = vst.msk [vmem:[%s146] sm:$0xff] %vm158, %v155
    %s160 = scalar_lea.vmem [#allocation1], 56
    %s161 = scalar_lea.vmem [#allocation0], 112
    %s162 = scalar_lea.vmem %s161, 7 [#allocation0]
    %v163 = vld [vmem:[%s162] ss:$-1 sm:$0xff]
    %v164 = vrot.slane %v163, 1
    %165 = vst [vmem:[%s160] sm:$0xff] %v164
    %s166 = scalar_lea.vmem %s161, 8 [#allocation0]
    %s167 = scalar_lea.vmem %s166, 7 [#allocation0]
    %v168 = vld [vmem:[%s167] ss:$-1 sm:$0xff]
    %v169 = vrot.slane %v168, 1
    %v170 = vlaneseq
    %v171 = vshrl.u32 %v170, 7
    %vm172 = vcmp.lt.s32.totalorder %v171, 7
    %173 = vst.msk [vmem:[%s160] sm:$0xff] %vm172, %v169
    // Predicated region
    $region36: #{reverse.0} parent=1 // pred_check
      _
    $region37: #{reverse.0} parent=1 // pred_check_branch
      %175 = sbr.rel (0) target = $region39
    $region38: #{reverse.0} parent=1 // pred_region
      // Predicated region
      $region40: #{reverse.0} parent=38 // pred_check
        _
      $region41: #{reverse.0} parent=38 // pred_check_branch
        %177 = sbr.rel (0) target = $region43
      $region42: #{reverse.0} parent=38 // pred_region
        // Predicated region
        $region55: #{reverse.0} parent=42 // pred_check
          _
        $region56: #{reverse.0} parent=42 // pred_check_branch
          %207 = sbr.rel (0) target = $region58
        $region57: #{reverse.0} parent=42 // pred_region
          loop: start=0, step=1, limit=1
          $region59: #{reverse.0} parent=57 // loop_pre_header
            _
          $region60: #{reverse.0} parent=57 // loop_header
            %s209 = sphi 0, %s213
            %p210 = scmp.ge.s32.totalorder %s209, 1
            %s214 = sphi [#allocation1], [#allocation1]
            %s215 = sphi %s1, %s1
          $region61: #{reverse.0} parent=57 // loop_header_branch
            %212 = sbr.rel (%p210) target = $region65
          $region62: #{reverse.0} parent=57 // loop_body
            %v216 = vld [vmem:[%s214] sm:$0xff]
            %217 = vst [vmem:[%s215] sm:$0xff] %v216
            %v218 = vld [vmem:[%s214 + $0x8] sm:$0xff]
            %219 = vst [vmem:[%s215 + $0x8] sm:$0xff] %v218
            %v220 = vld [vmem:[%s214 + $0x10] sm:$0xff]
            %221 = vst [vmem:[%s215 + $0x10] sm:$0xff] %v220
            %v222 = vld [vmem:[%s214 + $0x18] sm:$0xff]
            %223 = vst [vmem:[%s215 + $0x18] sm:$0xff] %v222
            %v224 = vld [vmem:[%s214 + $0x20] sm:$0xff]
            %225 = vst [vmem:[%s215 + $0x20] sm:$0xff] %v224
            %v226 = vld [vmem:[%s214 + $0x28] sm:$0xff]
            %227 = vst [vmem:[%s215 + $0x28] sm:$0xff] %v226
            %v228 = vld [vmem:[%s214 + $0x30] sm:$0xff]
            %229 = vst [vmem:[%s215 + $0x30] sm:$0xff] %v228
            %v230 = vld [vmem:[%s214 + $0x38] sm:$0xff]
            %231 = vst [vmem:[%s215 + $0x38] sm:$0xff] %v230
          $region63: #{reverse.0} parent=57 // loop_footer
            %s213 = sadd.s32 1, %s209
          $region64: #{reverse.0} parent=57 // loop_footer_branch
            %208 = sbr.rel target = $region60
          $region65: #{reverse.0} parent=57 // loop_exit
            _
        $region58: #{reverse.0} parent=42 // pred_fallthru
          _
        // Predicated region
        $region66: #{reverse.0} parent=42 // pred_check
          _
        $region67: #{reverse.0} parent=42 // pred_check_branch
          %233 = sbr.rel target = $region69
        $region68: #{reverse.0} parent=42 // pred_region
          _
        $region69: #{reverse.0} parent=42 // pred_fallthru
          _
      $region43: #{reverse.0} parent=38 // pred_fallthru
        _
      // Predicated region
      $region44: #{reverse.0} parent=38 // pred_check
        _
      $region45: #{reverse.0} parent=38 // pred_check_branch
        %179 = sbr.rel target = $region47
      $region46: #{reverse.0} parent=38 // pred_region
        %s181 = ssub.s32 256, 1
        loop: start=0, step=1, limit=1
        $region48: #{reverse.0} parent=46 // loop_pre_header
          _
        $region49: #{reverse.0} parent=46 // loop_header
          %s183 = sphi 0, %s187
          %p184 = scmp.ge.s32.totalorder %s183, 1
          %s188 = sphi [#allocation1], [#allocation1]
          %s189 = sphi %s1, %s1
        $region50: #{reverse.0} parent=46 // loop_header_branch
          %186 = sbr.rel (%p184) target = $region54
        $region51: #{reverse.0} parent=46 // loop_body
          %v190 = vld [vmem:[%s188] sm:%s181]
          %191 = vst [vmem:[%s189] sm:%s181] %v190
          %v192 = vld [vmem:[%s188 + $0x8] sm:%s181]
          %193 = vst [vmem:[%s189 + $0x8] sm:%s181] %v192
          %v194 = vld [vmem:[%s188 + $0x10] sm:%s181]
          %195 = vst [vmem:[%s189 + $0x10] sm:%s181] %v194
          %v196 = vld [vmem:[%s188 + $0x18] sm:%s181]
          %197 = vst [vmem:[%s189 + $0x18] sm:%s181] %v196
          %v198 = vld [vmem:[%s188 + $0x20] sm:%s181]
          %199 = vst [vmem:[%s189 + $0x20] sm:%s181] %v198
          %v200 = vld [vmem:[%s188 + $0x28] sm:%s181]
          %201 = vst [vmem:[%s189 + $0x28] sm:%s181] %v200
          %v202 = vld [vmem:[%s188 + $0x30] sm:%s181]
          %203 = vst [vmem:[%s189 + $0x30] sm:%s181] %v202
          %v204 = vld [vmem:[%s188 + $0x38] sm:%s181]
          %205 = vst [vmem:[%s189 + $0x38] sm:%s181] %v204
        $region52: #{reverse.0} parent=46 // loop_footer
          %s187 = sadd.s32 1, %s183
        $region53: #{reverse.0} parent=46 // loop_footer_branch
          %182 = sbr.rel target = $region49
        $region54: #{reverse.0} parent=46 // loop_exit
          _
      $region47: #{reverse.0} parent=38 // pred_fallthru
        _
    $region39: #{reverse.0} parent=1 // pred_fallthru
      _
    %234 = vnop

// kernel: fourier_unit_forward.1
$region0: #{fourier_unit_forward.1}
  #allocation0 [shape = 'u32[]', space=smem, size = 0x4, offset = 0x4, fixed_abs, tag = 'smem constant byte address 0x4 - core index']
  #allocation1 [shape = 'u32[144,128]{1,0:T(1,128)}', space=vmem, size = 0x12000, scoped, tag = 'internal scratch']
  %s0 = inlined_call_operand.vmem [shape: bf16[2,8,144], index: 0, kind: input, shape index: {}]
  %s1 = inlined_call_operand.vmem [shape: bf16[8,8], index: 1, kind: input, shape index: {}]
  %s2 = inlined_call_operand.vmem [shape: f32[8,1], index: 2, kind: input, shape index: {}]
  %s3 = inlined_call_operand.vmem [shape: bf16[2,8,144], index: 3, kind: output, shape index: {}]
  %s4 = sld [smem:[#allocation0]]
  $region45: #{fourier_unit_forward.1} parent=0
    _
  %s6 = ssub.s32 1, %s4
  %s7 = scalar_select 0, %s6, %s4
  loop: start=0, step=1, limit=4
  $region2: #{fourier_unit_forward.1} parent=0 // loop_pre_header
    _
  $region3: #{fourier_unit_forward.1} parent=0 // loop_header
    %s9 = sphi 0, %s13
    %p10 = scmp.ge.s32.totalorder %s9, 4
    %s16 = sphi 0, %s28
    %s17 = sphi 0, %s24
    %s18 = sphi 0, %s16
    %s19 = sphi 0, %s17
    %s20 = sphi 0, %s18
    %s21 = sphi 0, %s19
    %s33 = sphi 0, %s35
    %s36 = sphi 0, %s33
    %s37 = sphi 0, %s36
    %s53 = sphi 0, %s37
    %s57 = sphi 0, %s57
    %s59 = sphi 0, %s57
    %s60 = sphi 0, %s59
    %s74 = sphi 0, %s60
    %s78 = sphi 0, %s78
    %s80 = sphi 0, %s78
    %s81 = sphi 0, %s80
    %s95 = sphi 0, %s81
    %s103 = sphi 0, %s105
    %s106 = sphi 0, %s103
    %s107 = sphi 0, %s106
    %s123 = sphi 0, %s107
  $region4: #{fourier_unit_forward.1} parent=0 // loop_header_branch
    %12 = sbr.rel (%p10) target = $region8
  $region5: #{fourier_unit_forward.1} parent=0 // loop_body
    %s14 = ssub.s32 %s9, 1
    %s15 = ssub.s32 %s9, 2
    %s22 = sadd.s32 1, %s17
    %p23 = scmp.ge.s32.totalorder %s22, 1
    %s24 = scalar_select %p23, 0, %s22
    %s25 = sadd.s32 1, %s16
    %s26 = scalar_select %p23, %s25, %s16
    %p27 = scmp.ge.s32.totalorder %s26, 2
    %s28 = scalar_select %p27, 0, %s26
    %s29 = ssub.s32 %s16, %s28
    %s30 = ssub.s32 %s17, %s24
    %s31 = sor.u32 %s29, %s30
    %p32 = scmp.eq.s32.totalorder %s31, 0
    %s34 = sadd.s32 %s33, 1
    %s35 = scalar_select %p32, %s33, %s34
    %p38 = pneg %p32
    %p39 = scmp.eq.s32.totalorder %s9, 1
    %p40 = por %p38, %p39
    %p41 = scmp.ne.s32.totalorder %s33, %s36
    %p42 = scmp.eq.s32.totalorder %s9, 0
    %p43 = por %p41, %p42
    %p44 = scmp.ne.s32.totalorder %s33, %s36
    %p45 = scmp.eq.s32.totalorder %s14, 1
    %p46 = por %p44, %p45
    %p47 = scmp.ne.s32.totalorder %s36, %s37
    %p48 = scmp.eq.s32.totalorder %s14, 0
    %p49 = por %p47, %p48
    %p50 = scmp.ne.s32.totalorder %s36, %s37
    %p51 = scmp.eq.s32.totalorder %s15, 1
    %p52 = por %p50, %p51
    %p54 = scmp.ne.s32.totalorder %s37, %s53
    %p55 = scmp.eq.s32.totalorder %s15, 0
    %p56 = por %p54, %p55
    %s58 = sadd.s32 %s57, 1
    %p61 = scmp.eq.s32.totalorder %s9, 1
    %p62 = scmp.ne.s32.totalorder %s57, %s59
    %p63 = scmp.eq.s32.totalorder %s9, 0
    %p64 = por %p62, %p63
    %p65 = scmp.ne.s32.totalorder %s57, %s59
    %p66 = scmp.eq.s32.totalorder %s14, 1
    %p67 = por %p65, %p66
    %p68 = scmp.ne.s32.totalorder %s59, %s60
    %p69 = scmp.eq.s32.totalorder %s14, 0
    %p70 = por %p68, %p69
    %p71 = scmp.ne.s32.totalorder %s59, %s60
    %p72 = scmp.eq.s32.totalorder %s15, 1
    %p73 = por %p71, %p72
    %p75 = scmp.ne.s32.totalorder %s60, %s74
    %p76 = scmp.eq.s32.totalorder %s15, 0
    %p77 = por %p75, %p76
    %s79 = sadd.s32 %s78, 1
    %p82 = scmp.eq.s32.totalorder %s9, 1
    %p83 = scmp.ne.s32.totalorder %s78, %s80
    %p84 = scmp.eq.s32.totalorder %s9, 0
    %p85 = por %p83, %p84
    %p86 = scmp.ne.s32.totalorder %s78, %s80
    %p87 = scmp.eq.s32.totalorder %s14, 1
    %p88 = por %p86, %p87
    %p89 = scmp.ne.s32.totalorder %s80, %s81
    %p90 = scmp.eq.s32.totalorder %s14, 0
    %p91 = por %p89, %p90
    %p92 = scmp.ne.s32.totalorder %s80, %s81
    %p93 = scmp.eq.s32.totalorder %s15, 1
    %p94 = por %p92, %p93
    %p96 = scmp.ne.s32.totalorder %s81, %s95
    %p97 = scmp.eq.s32.totalorder %s15, 0
    %p98 = por %p96, %p97
    %s99 = ssub.s32 %s16, %s28
    %s100 = ssub.s32 %s17, %s24
    %s101 = sor.u32 %s99, %s100
    %p102 = scmp.eq.s32.totalorder %s101, 0
    %s104 = sadd.s32 %s103, 1
    %s105 = scalar_select %p102, %s103, %s104
    %p108 = pneg %p102
    %p109 = scmp.eq.s32.totalorder %s9, 1
    %p110 = por %p108, %p109
    %p111 = scmp.ne.s32.totalorder %s103, %s106
    %p112 = scmp.eq.s32.totalorder %s9, 0
    %p113 = por %p111, %p112
    %p114 = scmp.ne.s32.totalorder %s103, %s106
    %p115 = scmp.eq.s32.totalorder %s14, 1
    %p116 = por %p114, %p115
    %p117 = scmp.ne.s32.totalorder %s106, %s107
    %p118 = scmp.eq.s32.totalorder %s14, 0
    %p119 = por %p117, %p118
    %p120 = scmp.ne.s32.totalorder %s106, %s107
    %p121 = scmp.eq.s32.totalorder %s15, 1
    %p122 = por %p120, %p121
    %p124 = scmp.ne.s32.totalorder %s107, %s123
    %p125 = scmp.eq.s32.totalorder %s15, 0
    %p126 = por %p124, %p125
    %p127 = scmp.le.s32.totalorder 1, %s9
    %p128 = scmp.lt.s32.totalorder %s9, 3
    %p129 = pnand %p127, %p128
    %p130 = pneg %p129
    // Predicated region
    $region9: #{fourier_unit_forward.1} parent=5 // pred_check
      _
    $region10: #{fourier_unit_forward.1} parent=5 // pred_check_branch
      %132 = sbr.rel (%p129) target = $region12
    $region11: #{fourier_unit_forward.1} parent=5 // pred_region
      %s133 = ssub.s32 %s9, 1
      // Predicated region
      $region13: #{fourier_unit_forward.1} parent=11 // pred_check
        %p134 = pneg %p70
      $region14: #{fourier_unit_forward.1} parent=11 // pred_check_branch
        %136 = sbr.rel (%p134) target = $region16
      $region15: #{fourier_unit_forward.1} parent=11 // pred_region
        _
      $region16: #{fourier_unit_forward.1} parent=11 // pred_fallthru
        _
      // Predicated region
      $region17: #{fourier_unit_forward.1} parent=11 // pred_check
        %p137 = pneg %p91
      $region18: #{fourier_unit_forward.1} parent=11 // pred_check_branch
        %139 = sbr.rel (%p137) target = $region20
      $region19: #{fourier_unit_forward.1} parent=11 // pred_region
        _
      $region20: #{fourier_unit_forward.1} parent=11 // pred_fallthru
        _
    $region12: #{fourier_unit_forward.1} parent=5 // pred_fallthru
      _
    %p140 = scmp.lt.s32.totalorder %s9, 2
    // Predicated region
    $region21: #{fourier_unit_forward.1} parent=5 // pred_check
      %p141 = pneg %p140
    $region22: #{fourier_unit_forward.1} parent=5 // pred_check_branch
      %143 = sbr.rel (%p141) target = $region24
    $region23: #{fourier_unit_forward.1} parent=5 // pred_region
      // Predicated region
      $region25: #{fourier_unit_forward.1} parent=23 // pred_check
        %p144 = pneg %p43
      $region26: #{fourier_unit_forward.1} parent=23 // pred_check_branch
        %146 = sbr.rel (%p144) target = $region28
      $region27: #{fourier_unit_forward.1} parent=23 // pred_region
        %s147 = smul.u32 2, %s17
        %p148 = scmp.lt.s32.totalorder %s16, 1
        %s149 = scalar_select %p148, %s16, 1
        %p150 = scmp.lt.s32.totalorder %s147, 1
        %s151 = scalar_select %p150, %s147, 1
        %s152 = smul.addr %s149, 2
        %s153 = sadd.s32 %s151, %s152
        %s154 = smul.addr %s153, 4
        %s155 = scalar_lea.vmem %s0, %s154
        %s156 = smul.u32 2, %s17
      $region28: #{fourier_unit_forward.1} parent=23 // pred_fallthru
        _
    $region24: #{fourier_unit_forward.1} parent=5 // pred_fallthru
      _
    %p157 = scmp.le.s32.totalorder 1, %s9
    %p158 = scmp.lt.s32.totalorder %s9, 3
    %p159 = pnand %p157, %p158
    %p160 = pneg %p159
    // Predicated region
    $region29: #{fourier_unit_forward.1} parent=5 // pred_check
      _
    $region30: #{fourier_unit_forward.1} parent=5 // pred_check_branch
      %162 = sbr.rel (%p159) target = $region32
    $region31: #{fourier_unit_forward.1} parent=5 // pred_region
      %s163 = ssub.s32 %s9, 1
      %s164 = smul.u32 2, %s19
      %p165 = scmp.lt.s32.totalorder %s18, 1
      %s166 = scalar_select %p165, %s18, 1
      %p167 = scmp.lt.s32.totalorder %s164, 1
      %s168 = scalar_select %p167, %s164, 1
      %s169 = smul.addr %s166, 2
      %s170 = sadd.s32 %s168, %s169
      %s171 = smul.addr %s170, 4
      %s172 = scalar_lea.vmem %s0, %s171
      %p173 = pneg %p49
      %p174 = pneg %p46
      %p175 = pneg %p70
      %p176 = pneg %p67
      %p177 = pneg %p91
      %p178 = pneg %p88
      %p179 = pneg %p119
      %p180 = pneg %p116
      %s181 = smul.u32 2, %s19
      %p182 = scmp.lt.s32.totalorder %s18, 1
      %s183 = scalar_select %p182, %s18, 1
      %p184 = scmp.lt.s32.totalorder %s181, 1
      %s185 = scalar_select %p184, %s181, 1
      %s186 = smul.addr %s183, 2
      %s187 = sadd.s32 %s185, %s186
      %s188 = smul.addr %s187, 4
      %s189 = scalar_lea.vmem %s3, %s188
      %s190 = smul.u32 2, %s19
      %p191 = scmp.lt.s32.totalorder %s18, 1
      %s192 = scalar_select %p191, %s18, 1
      %p193 = scmp.lt.s32.totalorder %s190, 1
      %s194 = scalar_select %p193, %s190, 1
      %s195 = smul.addr %s192, 2
      %s196 = sadd.s32 %s194, %s195
      %s197 = smul.addr %s196, 4
      %s198 = scalar_lea.vmem %s0, %s197
      %s199 = smul.u32 2, %s19
      %s200 = smul.u32 2, %s19
      %p201 = scmp.lt.s32.totalorder %s18, 1
      %s202 = scalar_select %p201, %s18, 1
      %p203 = scmp.lt.s32.totalorder %s200, 1
      %s204 = scalar_select %p203, %s200, 1
      %s205 = smul.addr %s202, 2
      %s206 = sadd.s32 %s204, %s205
      %s207 = smul.addr %s206, 4
      %s208 = scalar_lea.vmem %s3, %s207
      %s209 = smul.u32 2, %s19
      %v211 = vld [vmem:[%s1] sm:$0xf]
      %v212 = vld [vmem:[%s198] sm:$0xff]
      %v213 = vld [vmem:[%s2] sm:$0xff]
      %215 = vset.pattern.permute.xlu0 0
      %216 = vperm.xlu0 %215, %v213
      %v217 = vpop.permute.xlu0 %216
      %v220 = vunpack.c.l.b16 %v212
      %v221 = vunpack.c.h.b16 %v212
      %v222 = vpack.c.b16 %v220, %v220
      %v223 = vpack.c.b16 %v221, %v221
      %vm224 = vcmask 64512
      %v226 = vsel %vm224, %v211, 0
      %vm228 = vcmask 1043456
      %v230 = vsel %vm228, %v222, 0
      %v233 = vsel %vm228, %v223, 0
      %235 = vmatprep.subr.bf16.mxu0 0
      %236 = vmatpush1.bf16.msra.mxu0 0
      %237 = vmatprep.subr.bf16.mxu0 0
      %238 = vmatpush1.bf16.msra.mxu0 0
      %239 = vmatprep.subr.bf16.mxu0 0
      %240 = vmatpush1.bf16.msra.mxu0 0
      %241 = vmatprep.subr.bf16.mxu0 0
      %242 = vmatpush1.bf16.msra.mxu0 0
      %243 = vmatprep.subr.bf16.mxu0 0
      %244 = vmatpush1.bf16.msra.mxu0 0
      %245 = vmatprep.subr.bf16.mxu0 0
      %246 = vmatpush1.bf16.msra.mxu0 0
      %247 = vmatprep.subr.bf16.mxu0 0
      %248 = vmatpush1.bf16.msra.mxu0 0
      %249 = vmatprep.subr.bf16.mxu0 %v233
      %250 = vmatpush1.bf16.msra.mxu0 %v230
      %251 = vmatprep.subr.bf16.mxu0 0
      %252 = vmatpush2.bf16.msra.mxu0 0
      %253 = vmatprep.subr.bf16.mxu0 0
      %254 = vmatpush2.bf16.msra.mxu0 0
      %255 = vmatprep.subr.bf16.mxu0 0
      %256 = vmatpush2.bf16.msra.mxu0 0
      %257 = vmatprep.subr.bf16.mxu0 0
      %258 = vmatpush2.bf16.msra.mxu0 0
      %259 = vmatprep.subr.bf16.mxu0 0
      %260 = vmatpush2.bf16.msra.mxu0 0
      %261 = vmatprep.subr.bf16.mxu0 0
      %262 = vmatpush2.bf16.msra.mxu0 0
      %263 = vmatprep.subr.bf16.mxu0 0
      %264 = vmatpush2.bf16.msra.mxu0 0
      %265 = vmatprep.subr.bf16.mxu0 0
      %266 = vmatpush2.bf16.msra.mxu0 0
      %267 = vmatprep.mubr.bf16.mxu0 0
      %268 = vmatmul.mubr.bf16.gmra.mxu0 %v226
      %v269 = vpop.f32.mrf.mxu0
      %v270 = vadd.f32 %v217, %v269
      %v271 = vpop.f32.mrf.mxu0
      %v272 = vadd.f32 %v217, %v271
      %v273 = vpop.f32.mrf.mxu0
      %v274 = vpop.f32.mrf.mxu0
      %275 = vdwg.mxu0
      %v276 = vmax.f32 %v270, 0.0
      %v277 = vmax.f32 %v272, 0.0
      %v278 = vpack.c.bf16 %v276, %v276
      %v279 = vpack.c.bf16 %v277, %v277
      %v282 = vunpack.c.l.b16 %v278
      %v283 = vunpack.c.l.b16 %v279
      %v284 = vpack.c.b16 %v283, %v282
      %286 = vst [vmem:[%s208] sm:$0xff] %v284
      %s287 = smul.u32 2, %s19
      %p288 = scmp.lt.s32.totalorder %s18, 1
      %s289 = scalar_select %p288, %s18, 1
      %p290 = scmp.lt.s32.totalorder %s287, 1
      %s291 = scalar_select %p290, %s287, 1
      %s292 = smul.addr %s289, 2
      %s293 = sadd.s32 %s291, %s292
      %s294 = smul.addr %s293, 4
      %s295 = scalar_lea.vmem %s3, %s294
      // Predicated region
      $region33: #{fourier_unit_forward.1} parent=31 // pred_check
        %p296 = pneg %p116
      $region34: #{fourier_unit_forward.1} parent=31 // pred_check_branch
        %298 = sbr.rel (%p296) target = $region36
      $region35: #{fourier_unit_forward.1} parent=31 // pred_region
        %s299 = smul.u32 2, %s19
      $region36: #{fourier_unit_forward.1} parent=31 // pred_fallthru
        _
    $region32: #{fourier_unit_forward.1} parent=5 // pred_fallthru
      _
    %p300 = scmp.le.s32.totalorder 2, %s9
    // Predicated region
    $region37: #{fourier_unit_forward.1} parent=5 // pred_check
      %p301 = pneg %p300
    $region38: #{fourier_unit_forward.1} parent=5 // pred_check_branch
      %303 = sbr.rel (%p301) target = $region40
    $region39: #{fourier_unit_forward.1} parent=5 // pred_region
      %s304 = ssub.s32 %s9, 2
      // Predicated region
      $region41: #{fourier_unit_forward.1} parent=39 // pred_check
        %p305 = pneg %p122
      $region42: #{fourier_unit_forward.1} parent=39 // pred_check_branch
        %307 = sbr.rel (%p305) target = $region44
      $region43: #{fourier_unit_forward.1} parent=39 // pred_region
        %s308 = smul.u32 2, %s21
        %p309 = scmp.lt.s32.totalorder %s20, 1
        %s310 = scalar_select %p309, %s20, 1
        %p311 = scmp.lt.s32.totalorder %s308, 1
        %s312 = scalar_select %p311, %s308, 1
        %s313 = smul.addr %s310, 2
        %s314 = sadd.s32 %s312, %s313
        %s315 = smul.addr %s314, 4
        %s316 = scalar_lea.vmem %s3, %s315
      $region44: #{fourier_unit_forward.1} parent=39 // pred_fallthru
        _
    $region40: #{fourier_unit_forward.1} parent=5 // pred_fallthru
      _
  $region6: #{fourier_unit_forward.1} parent=0 // loop_footer
    %s13 = sadd.s32 1, %s9
  $region7: #{fourier_unit_forward.1} parent=0 // loop_footer_branch
    %8 = sbr.rel target = $region3
  $region8: #{fourier_unit_forward.1} parent=0 // loop_exit
    _

</llo_original>
